<compile_context>
chip_gen: v6e
topology: v6e:2x2x1
jax: 0.10.0
libtpu: 0.0.40
codegen_flags: <defaults>
</compile_context>

<pallas_src>
import math

import jax
import jax.numpy as jnp
from jax.experimental import pallas as pl
from jax.experimental.pallas import tpu as pltpu


def _round_up(x, m):
    return ((x + m - 1) // m) * m


def _value_mlp_kernel(xt_ref, w1t_ref, w2t_ref, packed_ref, o_ref):
    """One batch tile (batch on lanes) of the ValueNetwork forward pass.

    xt_ref:     (num_inputs, tile_b)  state tile, feature-major.
    w1t_ref:    (hidden, num_inputs)  W1 transposed (resident).
    w2t_ref:    (hidden, hidden)      W2 transposed (resident).
    packed_ref: (hidden, 4) f32, columns: 0=b1, 1=b2, 2=w3, 3=[b3, 0, ...].
    o_ref:      (1, tile_b) f32, lane-dense output row.

    Matmuls accumulate in f32 on the MXU; bias/ReLU/reduce run in f32 on the
    VPU/XLU, so a bf16 compute_dtype only ever touches MXU operands.
    """
    b1 = packed_ref[:, 0:1]      # (hidden, 1) — broadcasts over lanes (batch)
    b2 = packed_ref[:, 1:2]
    w3 = packed_ref[:, 2:3]
    b3 = packed_ref[0:1, 3:4]    # (1, 1)

    # linear1 + relu: (hidden, K=num_inputs) @ (num_inputs, tile_b)
    h1 = jnp.dot(w1t_ref[...], xt_ref[...], preferred_element_type=jnp.float32)
    h1 = jnp.maximum(h1 + b1, 0.0)

    # linear2 + relu: (hidden, hidden) @ (hidden, tile_b); cast only the MXU
    # operand back to the weight dtype.
    h2 = jnp.dot(w2t_ref[...], h1.astype(w2t_ref.dtype),
                 preferred_element_type=jnp.float32)
    h2 = jnp.maximum(h2 + b2, 0.0)

    # linear3 (single output): VPU multiply + XLU sublane reduce -> (1, tile_b)
    # lane-dense row, instead of a 1-wide MXU matmul + masked column stores.
    out = jnp.sum(h2 * w3, axis=0, keepdims=True) + b3
    o_ref[...] = out.astype(o_ref.dtype)


def value_network_forward(state, w1, b1, w2, b2, w3, b3, *,
                          tile_b=1024, compute_dtype=jnp.bfloat16,
                          core_parallel=False):
    """Forward pass of ValueNetwork.

    state: (batch, num_inputs) f32.  Weights given as (in, out) [transposed vs
    PyTorch], biases as vectors / scalar.  Returns (batch, 1) f32.
    """
    batch, num_inputs = state.shape
    hidden = w1.shape[1]
    compute_dtype = jnp.dtype(compute_dtype)

    # Batch now lives on the lane axis: tile_b must be a multiple of 128.
    # Keep tiles large (per-step overhead dominates small tiles) but avoid
    # over-padding tiny batches.
    tile_b = max(128, min(int(tile_b), _round_up(batch, 128)))
    tile_b = _round_up(tile_b, 128)
    padded_batch = _round_up(batch, tile_b)
    grid = (padded_batch // tile_b,)

    # Feature-major state: (num_inputs, padded_batch).  Padded columns compute
    # relu(b*)-derived garbage that is sliced off below (no in-kernel batch
    # reductions, so this is safe).
    xt = state.astype(compute_dtype).T
    if padded_batch != batch:
        xt = jnp.pad(xt, ((0, 0), (0, padded_batch - batch)))

    w1t = jnp.asarray(w1, compute_dtype).T      # (hidden, num_inputs)
    w2t = jnp.asarray(w2, compute_dtype).T      # (hidden, hidden)

    # Pack the small per-layer vectors into one resident f32 block,
    # feature-major so biases broadcast over lanes without any relayout.
    packed = jnp.zeros((hidden, 4), jnp.float32)
    packed = packed.at[:, 0].set(jnp.asarray(b1, jnp.float32).reshape(hidden))
    packed = packed.at[:, 1].set(jnp.asarray(b2, jnp.float32).reshape(hidden))
    packed = packed.at[:, 2].set(jnp.asarray(w3, jnp.float32).reshape(hidden))
    packed = packed.at[0, 3].set(jnp.asarray(b3, jnp.float32).reshape(()))

    itemsize = compute_dtype.itemsize
    cost = pl.CostEstimate(
        flops=2 * padded_batch * (num_inputs * hidden + hidden * hidden + hidden),
        transcendentals=0,
        bytes_accessed=(padded_batch * num_inputs * itemsize
                        + (num_inputs * hidden + hidden * hidden) * itemsize
                        + hidden * 4 * 4
                        + padded_batch * 4),
    )

    # "parallel" is a no-op on single-TC chips; core_parallel=True requests an
    # explicit split of the batch grid across v7x's two TensorCores.
    batch_sem = pltpu.CORE_PARALLEL if core_parallel else pltpu.PARALLEL

    out_t = pl.pallas_call(
        _value_mlp_kernel,
        out_shape=jax.ShapeDtypeStruct((1, padded_batch), jnp.float32),
        grid=grid,
        in_specs=[
            pl.BlockSpec((num_inputs, tile_b), lambda i: (0, i)),   # state tile
            pl.BlockSpec((hidden, num_inputs), lambda i: (0, 0)),   # W1^T resident
            pl.BlockSpec((hidden, hidden), lambda i: (0, 0)),       # W2^T resident
            pl.BlockSpec((hidden, 4), lambda i: (0, 0)),            # b1/b2/w3/b3
        ],
        out_specs=pl.BlockSpec((1, tile_b), lambda i: (0, i)),      # lane-dense
        compiler_params=pltpu.CompilerParams(
            dimension_semantics=(batch_sem,),
        ),
        cost_estimate=cost,
    )(xt, w1t, w2t, packed)

    return out_t[0, :batch].reshape(batch, 1)


def value_network_reference(state, w1, b1, w2, b2, w3, b3):
    hp = jax.lax.Precision.HIGHEST
    h = jnp.maximum(jnp.dot(state, w1, precision=hp) + b1.reshape(1, -1), 0.0)
    h = jnp.maximum(jnp.dot(h, w2, precision=hp) + b2.reshape(1, -1), 0.0)
    return (jnp.dot(h, w3.reshape(-1, 1), precision=hp)
            + jnp.asarray(b3, jnp.float32).reshape(1, 1))


def xavier_uniform(key, fan_in, fan_out, gain=1.0):
    # Matches torch.nn.init.xavier_uniform_ (stored here as (in, out)).
    bound = gain * math.sqrt(6.0 / (fan_in + fan_out))
    return jax.random.uniform(key, (fan_in, fan_out), dtype=jnp.float32,
                              minval=-bound, maxval=bound)


def init_value_network_params(key, num_inputs, hidden_dim):
    k1, k2, k3 = jax.random.split(key, 3)
    w1 = xavier_uniform(k1, num_inputs, hidden_dim)
    b1 = jnp.zeros((hidden_dim,), jnp.float32)
    w2 = xavier_uniform(k2, hidden_dim, hidden_dim)
    b2 = jnp.zeros((hidden_dim,), jnp.float32)
    w3 = xavier_uniform(k3, hidden_dim, 1)
    b3 = jnp.zeros((), jnp.float32)
    return w1, b1, w2, b2, w3, b3


if __name__ == "__main__":
    key = jax.random.PRNGKey(0)
    k_state, k_params, kb1, kb2, kb3, k_big = jax.random.split(key, 6)

    num_inputs = 8     # state dimension
    hidden_dim = 32

    w1, b1, w2, b2, w3, b3 = init_value_network_params(k_params, num_inputs,
                                                       hidden_dim)
    # PyTorch init uses zero biases; use non-zero biases here so the bias path
    # is actually exercised by the correctness check.
    b1 = 0.1 * jax.random.normal(kb1, (hidden_dim,), jnp.float32)
    b2 = 0.1 * jax.random.normal(kb2, (hidden_dim,), jnp.float32)
    b3 = 0.1 * jax.random.normal(kb3, (), jnp.float32)
    params = (w1, b1, w2, b2, w3, b3)

    # 1) Small-shape check (batch=2), f32 MXU-operand path.
    #    (The kernel's f32 matmul uses the MXU's default f32 handling; the
    #    reference uses Precision.HIGHEST — tolerances below absorb this.)
    state_small = jax.random.normal(k_state, (2, num_inputs), jnp.float32)
    out_small = jax.block_until_ready(
        value_network_forward(state_small, *params, compute_dtype=jnp.float32))
    ref_small = value_network_reference(state_small, *params)
    assert out_small.shape == (2, 1)
    assert jnp.allclose(out_small, ref_small, atol=1e-4, rtol=1e-4)

    # 2) Ragged multi-tile check (grid > 1 plus lane padding), f32 path.
    state_big = jax.random.normal(k_big, (2500, num_inputs), jnp.float32)
    out_big = jax.block_until_ready(
        value_network_forward(state_big, *params, tile_b=1024,
                              compute_dtype=jnp.float32))
    ref_big = value_network_reference(state_big, *params)
    assert out_big.shape == (2500, 1)
    assert jnp.allclose(out_big, ref_big, atol=1e-4, rtol=1e-4)

    # 3) Default bf16 MXU-operand path (bandwidth optimization; looser tol —
    #    activations between layers are also bf16-quantized).
    out_bf16 = jax.block_until_ready(
        value_network_forward(state_big, *params, tile_b=1024))
    assert out_bf16.shape == (2500, 1)
    assert jnp.allclose(out_bf16, ref_big, atol=5e-2, rtol=5e-2)

    print("KERNEL_OK")
</pallas_src>

<mosaic_0001>
module attributes {stable_mosaic.version = 11 : i64} {
  func.func @_value_mlp_kernel(%arg0: i32, %arg1: memref<8x128xf32, #tpu.memory_space<vmem>>, %arg2: memref<32x8xf32, #tpu.memory_space<vmem>>, %arg3: memref<32x32xf32, #tpu.memory_space<vmem>>, %arg4: memref<32x4xf32, #tpu.memory_space<vmem>>, %arg5: memref<1x128xf32, #tpu.memory_space<vmem>>) attributes {dimension_semantics = [#tpu.dimension_semantics<parallel>], iteration_bounds = array<i64: 1>, scalar_prefetch = 0 : i64, scratch_operands = 0 : i64, tpu.core_type = #tpu.core_type<tc>, window_params = [{transform_indices = @transform_0, window_bounds = array<i64: 8, 128>}, {pipeline_mode = #tpu.pipeline_mode<synchronous>, transform_indices = @transform_1, window_bounds = array<i64: 32, 8>}, {pipeline_mode = #tpu.pipeline_mode<synchronous>, transform_indices = @transform_2, window_bounds = array<i64: 32, 32>}, {pipeline_mode = #tpu.pipeline_mode<synchronous>, transform_indices = @transform_3, window_bounds = array<i64: 32, 4>}, {transform_indices = @transform_4, window_bounds = array<i64: 1, 128>}]} {
    %c0 = arith.constant 0 : index
    %c0_0 = arith.constant 0 : index
    %0 = vector.load %arg4[%c0, %c0_0] : memref<32x4xf32, #tpu.memory_space<vmem>>, vector<32x1xf32>
    %c0_1 = arith.constant 0 : index
    %c1 = arith.constant 1 : index
    %1 = vector.load %arg4[%c0_1, %c1] : memref<32x4xf32, #tpu.memory_space<vmem>>, vector<32x1xf32>
    %c0_2 = arith.constant 0 : index
    %c2 = arith.constant 2 : index
    %2 = vector.load %arg4[%c0_2, %c2] : memref<32x4xf32, #tpu.memory_space<vmem>>, vector<32x1xf32>
    %c0_3 = arith.constant 0 : index
    %c3 = arith.constant 3 : index
    %3 = vector.load %arg4[%c0_3, %c3] : memref<32x4xf32, #tpu.memory_space<vmem>>, vector<1x1xf32>
    %c0_4 = arith.constant 0 : index
    %c0_5 = arith.constant 0 : index
    %4 = vector.load %arg2[%c0_4, %c0_5] : memref<32x8xf32, #tpu.memory_space<vmem>>, vector<32x8xf32>
    %c0_6 = arith.constant 0 : index
    %c0_7 = arith.constant 0 : index
    %5 = vector.load %arg1[%c0_6, %c0_7] : memref<8x128xf32, #tpu.memory_space<vmem>>, vector<8x128xf32>
    %cst = arith.constant dense<0.000000e+00> : vector<32x128xf32>
    %6 = tpu.matmul %4, %5, %cst {dimension_numbers = #tpu.dot_dimension_numbers<[1], [0], [0], [1], [0, 0, 1, 1], [], []>} : vector<32x8xf32>, vector<8x128xf32>, vector<32x128xf32> -> vector<32x128xf32>
    %7 = vector.broadcast %0 : vector<32x1xf32> to vector<32x128xf32>
    %8 = arith.addf %6, %7 : vector<32x128xf32>
    %cst_8 = arith.constant 0.000000e+00 : f32
    %9 = vector.broadcast %cst_8 : f32 to vector<32x128xf32>
    %10 = arith.maximumf %8, %9 : vector<32x128xf32>
    %c0_9 = arith.constant 0 : index
    %c0_10 = arith.constant 0 : index
    %11 = vector.load %arg3[%c0_9, %c0_10] : memref<32x32xf32, #tpu.memory_space<vmem>>, vector<32x32xf32>
    %cst_11 = arith.constant dense<0.000000e+00> : vector<32x128xf32>
    %12 = tpu.matmul %11, %10, %cst_11 {dimension_numbers = #tpu.dot_dimension_numbers<[1], [0], [0], [1], [0, 0, 1, 1], [], []>} : vector<32x32xf32>, vector<32x128xf32>, vector<32x128xf32> -> vector<32x128xf32>
    %13 = vector.broadcast %1 : vector<32x1xf32> to vector<32x128xf32>
    %14 = arith.addf %12, %13 : vector<32x128xf32>
    %cst_12 = arith.constant 0.000000e+00 : f32
    %15 = vector.broadcast %cst_12 : f32 to vector<32x128xf32>
    %16 = arith.maximumf %14, %15 : vector<32x128xf32>
    %17 = vector.broadcast %2 : vector<32x1xf32> to vector<32x128xf32>
    %18 = arith.mulf %16, %17 : vector<32x128xf32>
    %cst_13 = arith.constant dense<0.000000e+00> : vector<128xf32>
    %19 = vector.multi_reduction <add>, %18, %cst_13 [0] : vector<32x128xf32> to vector<128xf32>
    %20 = vector.shape_cast %19 : vector<128xf32> to vector<1x128xf32>
    %21 = vector.broadcast %3 : vector<1x1xf32> to vector<1x128xf32>
    %22 = arith.addf %20, %21 : vector<1x128xf32>
    %c0_14 = arith.constant 0 : index
    %c0_15 = arith.constant 0 : index
    %23 = vector.load %arg5[%c0_14, %c0_15] : memref<1x128xf32, #tpu.memory_space<vmem>>, vector<1x128xf32>
    tpu.vector_store %arg5[%c0_14, %c0_15], %22 {strides = array<i32>} : memref<1x128xf32, #tpu.memory_space<vmem>>, vector<1x128xf32>,
    return
  }
  func.func @transform_0(%arg0: i32) -> (i32, i32) {
    %c0_i32 = arith.constant 0 : i32
    %c0_i32_0 = arith.constant 0 : i32
    return %c0_i32, %arg0 : i32, i32
  }
  func.func @transform_1(%arg0: i32) -> (i32, i32) {
    %c0_i32 = arith.constant 0 : i32
    %c0_i32_0 = arith.constant 0 : i32
    %c0_i32_1 = arith.constant 0 : i32
    return %c0_i32, %c0_i32_0 : i32, i32
  }
  func.func @transform_2(%arg0: i32) -> (i32, i32) {
    %c0_i32 = arith.constant 0 : i32
    %c0_i32_0 = arith.constant 0 : i32
    %c0_i32_1 = arith.constant 0 : i32
    return %c0_i32, %c0_i32_0 : i32, i32
  }
  func.func @transform_3(%arg0: i32) -> (i32, i32) {
    %c0_i32 = arith.constant 0 : i32
    %c0_i32_0 = arith.constant 0 : i32
    %c0_i32_1 = arith.constant 0 : i32
    return %c0_i32, %c0_i32_0 : i32, i32
  }
  func.func @transform_4(%arg0: i32) -> (i32, i32) {
    %c0_i32 = arith.constant 0 : i32
    %c0_i32_0 = arith.constant 0 : i32
    return %c0_i32, %arg0 : i32, i32
  }
}

</mosaic_0001>

<llo_original>
// kernel: tpu_custom_call.1
$region0: #{tpu_custom_call.1}
  #allocation0 [shape = 'u32[]', space=smem, size = 0x4, offset = 0x4, fixed_abs, tag = 'smem constant byte address 0x4 - core index']
  #allocation1 [shape = 'u32[144,128]{1,0:T(1,128)}', space=vmem, size = 0x12000, scoped, tag = 'internal scratch']
  %s0 = inlined_call_operand.vmem [shape: f32[8,128], index: 0, kind: input, shape index: {}]
  %s1 = inlined_call_operand.vmem [shape: f32[32,8], index: 1, kind: input, shape index: {}]
  %s2 = inlined_call_operand.vmem [shape: f32[32,32], index: 2, kind: input, shape index: {}]
  %s3 = inlined_call_operand.vmem [shape: f32[32,4], index: 3, kind: input, shape index: {}]
  %s4 = inlined_call_operand.hbm [shape: f32[1,128], index: 4, kind: output, shape index: {}]
  %s5 = sld [smem:[#allocation0]]
  $region26: #{tpu_custom_call.1} parent=0
    _
  %s7 = ssub.s32 1, %s5
  %s8 = scalar_select 0, %s7, %s5
  $region1: #{tpu_custom_call.1} parent=0
    #allocation2 [shape = 'u8[512]{0}', space=vmem, size = 0x400, scoped, tag = 'output window, operand 0, single buffered']
    #allocation3 [shape = 's32[1]{0}', space=sflag, size = 0x4, scoped, tag = 'scoped memory for tpu_custom_call.1']
    %9 = vsyncpa [#allocation3], 0
    // Predicated region
    $region2: #{tpu_custom_call.1} parent=1 // pred_check
      _
    $region3: #{tpu_custom_call.1} parent=1 // pred_check_branch
      %11 = sbr.rel (0) target = $region5
    $region4: #{tpu_custom_call.1} parent=1 // pred_region
      _
    $region5: #{tpu_custom_call.1} parent=1 // pred_fallthru
      _
    // Predicated region
    $region6: #{tpu_custom_call.1} parent=1 // pred_check
      _
    $region7: #{tpu_custom_call.1} parent=1 // pred_check_branch
      %13 = sbr.rel (0) target = $region9
    $region8: #{tpu_custom_call.1} parent=1 // pred_region
      _
    $region9: #{tpu_custom_call.1} parent=1 // pred_fallthru
      _
    // Predicated region
    $region10: #{tpu_custom_call.1} parent=1 // pred_check
      _
    $region11: #{tpu_custom_call.1} parent=1 // pred_check_branch
      %15 = sbr.rel (0) target = $region13
    $region12: #{tpu_custom_call.1} parent=1 // pred_region
      _
    $region13: #{tpu_custom_call.1} parent=1 // pred_fallthru
      _
    // Predicated region
    $region14: #{tpu_custom_call.1} parent=1 // pred_check
      _
    $region15: #{tpu_custom_call.1} parent=1 // pred_check_branch
      %17 = sbr.rel (0) target = $region17
    $region16: #{tpu_custom_call.1} parent=1 // pred_region
      _
    $region17: #{tpu_custom_call.1} parent=1 // pred_fallthru
      _
    %v18 = vld [vmem:[%s3] sm:$0xff]
    %v19 = vld [vmem:[%s3 + $0x8] sm:$0xff]
    %v20 = vld [vmem:[%s3 + $0x10] sm:$0xff]
    %v21 = vld [vmem:[%s3 + $0x18] sm:$0xff]
    %v22 = vld [vmem:[%s3] sm:$0x1]
    %v23 = vld [vmem:[%s1] sm:$0xff]
    %v24 = vld [vmem:[%s1 + $0x8] sm:$0xff]
    %v25 = vld [vmem:[%s1 + $0x10] sm:$0xff]
    %v26 = vld [vmem:[%s1 + $0x18] sm:$0xff]
    %v27 = vld [vmem:[%s0] sm:$0xff]
    %29 = vset.pattern.permute.xlu0 0
    %30 = vperm.xlu0 %29, %v18
    %v31 = vpop.permute.xlu0 %30
    %34 = vset.pattern.permute.xlu0 0
    %35 = vperm.xlu0 %34, %v19
    %v36 = vpop.permute.xlu0 %35
    %39 = vset.pattern.permute.xlu0 0
    %40 = vperm.xlu0 %39, %v20
    %v41 = vpop.permute.xlu0 %40
    %44 = vset.pattern.permute.xlu0 0
    %45 = vperm.xlu0 %44, %v21
    %v46 = vpop.permute.xlu0 %45
    %vm48 = vcmask 64512
    %v50 = vsel %vm48, %v23, 0
    %v53 = vsel %vm48, %v24, 0
    %v56 = vsel %vm48, %v25, 0
    %v59 = vsel %vm48, %v26, 0
    %61 = vmatprep.subr.mxu0 0.0
    %62 = vmatpush1.msra.mxu0 0.0
    %63 = vmatprep.subr.mxu0 0.0
    %64 = vmatpush1.msra.mxu0 0.0
    %65 = vmatprep.subr.mxu0 0.0
    %66 = vmatpush1.msra.mxu0 0.0
    %67 = vmatprep.subr.mxu0 0.0
    %68 = vmatpush1.msra.mxu0 0.0
    %69 = vmatprep.subr.mxu0 0.0
    %70 = vmatpush1.msra.mxu0 0.0
    %71 = vmatprep.subr.mxu0 0.0
    %72 = vmatpush1.msra.mxu0 0.0
    %73 = vmatprep.subr.mxu0 0.0
    %74 = vmatpush1.msra.mxu0 0.0
    %75 = vmatprep.subr.mxu0 0.0
    %76 = vmatpush1.msra.mxu0 0.0
    %77 = vmatprep.subr.mxu0 0.0
    %78 = vmatpush1.msra.mxu0 0.0
    %79 = vmatprep.subr.mxu0 0.0
    %80 = vmatpush1.msra.mxu0 0.0
    %81 = vmatprep.subr.mxu0 0.0
    %82 = vmatpush1.msra.mxu0 0.0
    %83 = vmatprep.subr.mxu0 0.0
    %84 = vmatpush1.msra.mxu0 0.0
    %85 = vmatprep.subr.mxu0 0.0
    %86 = vmatpush1.msra.mxu0 0.0
    %87 = vmatprep.subr.mxu0 0.0
    %88 = vmatpush1.msra.mxu0 0.0
    %89 = vmatprep.subr.mxu0 0.0
    %90 = vmatpush1.msra.mxu0 0.0
    %91 = vmatprep.subr.mxu0 0.0
    %92 = vmatpush1.msra.mxu0 %v27
    %93 = vmatprep.subr.mxu0 0.0
    %94 = vmatpush2.msra.mxu0 0.0
    %95 = vmatprep.subr.mxu0 0.0
    %96 = vmatpush2.msra.mxu0 0.0
    %97 = vmatprep.subr.mxu0 0.0
    %98 = vmatpush2.msra.mxu0 0.0
    %99 = vmatprep.subr.mxu0 0.0
    %100 = vmatpush2.msra.mxu0 0.0
    %101 = vmatprep.subr.mxu0 0.0
    %102 = vmatpush2.msra.mxu0 0.0
    %103 = vmatprep.subr.mxu0 0.0
    %104 = vmatpush2.msra.mxu0 0.0
    %105 = vmatprep.subr.mxu0 0.0
    %106 = vmatpush2.msra.mxu0 0.0
    %107 = vmatprep.subr.mxu0 0.0
    %108 = vmatpush2.msra.mxu0 0.0
    %109 = vmatprep.subr.mxu0 0.0
    %110 = vmatpush2.msra.mxu0 0.0
    %111 = vmatprep.subr.mxu0 0.0
    %112 = vmatpush2.msra.mxu0 0.0
    %113 = vmatprep.subr.mxu0 0.0
    %114 = vmatpush2.msra.mxu0 0.0
    %115 = vmatprep.subr.mxu0 0.0
    %116 = vmatpush2.msra.mxu0 0.0
    %117 = vmatprep.subr.mxu0 0.0
    %118 = vmatpush2.msra.mxu0 0.0
    %119 = vmatprep.subr.mxu0 0.0
    %120 = vmatpush2.msra.mxu0 0.0
    %121 = vmatprep.subr.mxu0 0.0
    %122 = vmatpush2.msra.mxu0 0.0
    %123 = vmatprep.subr.mxu0 0.0
    %124 = vmatpush2.msra.mxu0 0.0
    %125 = vmatprep.mubr.f32.mxu0 0.0
    %126 = vmatmul.mubr.f32.gmra.mxu0 %v50
    %v127 = vpop.f32.mrf.mxu0
    %v128 = vadd.f32 %v31, %v127
    %v129 = vpop.f32.mrf.mxu0
    %130 = vmatprep.mubr.f32.mxu0 0.0
    %131 = vmatmul.mubr.f32.gmra.mxu0 %v53
    %v132 = vpop.f32.mrf.mxu0
    %v133 = vadd.f32 %v36, %v132
    %v134 = vpop.f32.mrf.mxu0
    %135 = vmatprep.mubr.f32.mxu0 0.0
    %136 = vmatmul.mubr.f32.gmra.mxu0 %v56
    %v137 = vpop.f32.mrf.mxu0
    %v138 = vadd.f32 %v41, %v137
    %v139 = vpop.f32.mrf.mxu0
    %140 = vmatprep.mubr.f32.mxu0 0.0
    %141 = vmatmul.mubr.f32.gmra.mxu0 %v59
    %v142 = vpop.f32.mrf.mxu0
    %v143 = vadd.f32 %v46, %v142
    %v144 = vpop.f32.mrf.mxu0
    %145 = vdwg.mxu0
    %v146 = vmax.f32 %v128, 0.0
    %v147 = vmax.f32 %v133, 0.0
    %v148 = vmax.f32 %v138, 0.0
    %v149 = vmax.f32 %v143, 0.0
    %v150 = vld [vmem:[%s2] sm:$0xff]
    %v151 = vld [vmem:[%s2 + $0x8] sm:$0xff]
    %v152 = vld [vmem:[%s2 + $0x10] sm:$0xff]
    %v153 = vld [vmem:[%s2 + $0x18] sm:$0xff]
    %154 = vset.pattern.permute.xlu0 1
    %155 = vperm.xlu0 %154, %v18
    %v156 = vpop.permute.xlu0 %155
    %158 = vset.pattern.permute.xlu0 1
    %159 = vperm.xlu0 %158, %v19
    %v160 = vpop.permute.xlu0 %159
    %162 = vset.pattern.permute.xlu0 1
    %163 = vperm.xlu0 %162, %v20
    %v164 = vpop.permute.xlu0 %163
    %166 = vset.pattern.permute.xlu0 1
    %167 = vperm.xlu0 %166, %v21
    %v168 = vpop.permute.xlu0 %167
    %vm170 = vcmask 261120
    %v172 = vsel %vm170, %v150, 0
    %v175 = vsel %vm170, %v151, 0
    %v178 = vsel %vm170, %v152, 0
    %v181 = vsel %vm170, %v153, 0
    %183 = vmatprep.subr.mxu0 0.0
    %184 = vmatpush1.msra.mxu0 0.0
    %185 = vmatprep.subr.mxu0 0.0
    %186 = vmatpush1.msra.mxu0 0.0
    %187 = vmatprep.subr.mxu0 0.0
    %188 = vmatpush1.msra.mxu0 0.0
    %189 = vmatprep.subr.mxu0 0.0
    %190 = vmatpush1.msra.mxu0 0.0
    %191 = vmatprep.subr.mxu0 0.0
    %192 = vmatpush1.msra.mxu0 0.0
    %193 = vmatprep.subr.mxu0 0.0
    %194 = vmatpush1.msra.mxu0 0.0
    %195 = vmatprep.subr.mxu0 0.0
    %196 = vmatpush1.msra.mxu0 0.0
    %197 = vmatprep.subr.mxu0 0.0
    %198 = vmatpush1.msra.mxu0 0.0
    %199 = vmatprep.subr.mxu0 0.0
    %200 = vmatpush1.msra.mxu0 0.0
    %201 = vmatprep.subr.mxu0 0.0
    %202 = vmatpush1.msra.mxu0 0.0
    %203 = vmatprep.subr.mxu0 0.0
    %204 = vmatpush1.msra.mxu0 0.0
    %205 = vmatprep.subr.mxu0 0.0
    %206 = vmatpush1.msra.mxu0 0.0
    %207 = vmatprep.subr.mxu0 0.0
    %208 = vmatpush1.msra.mxu0 %v149
    %209 = vmatprep.subr.mxu0 0.0
    %210 = vmatpush1.msra.mxu0 %v148
    %211 = vmatprep.subr.mxu0 0.0
    %212 = vmatpush1.msra.mxu0 %v147
    %213 = vmatprep.subr.mxu0 0.0
    %214 = vmatpush1.msra.mxu0 %v146
    %215 = vmatprep.subr.mxu0 0.0
    %216 = vmatpush2.msra.mxu0 0.0
    %217 = vmatprep.subr.mxu0 0.0
    %218 = vmatpush2.msra.mxu0 0.0
    %219 = vmatprep.subr.mxu0 0.0
    %220 = vmatpush2.msra.mxu0 0.0
    %221 = vmatprep.subr.mxu0 0.0
    %222 = vmatpush2.msra.mxu0 0.0
    %223 = vmatprep.subr.mxu0 0.0
    %224 = vmatpush2.msra.mxu0 0.0
    %225 = vmatprep.subr.mxu0 0.0
    %226 = vmatpush2.msra.mxu0 0.0
    %227 = vmatprep.subr.mxu0 0.0
    %228 = vmatpush2.msra.mxu0 0.0
    %229 = vmatprep.subr.mxu0 0.0
    %230 = vmatpush2.msra.mxu0 0.0
    %231 = vmatprep.subr.mxu0 0.0
    %232 = vmatpush2.msra.mxu0 0.0
    %233 = vmatprep.subr.mxu0 0.0
    %234 = vmatpush2.msra.mxu0 0.0
    %235 = vmatprep.subr.mxu0 0.0
    %236 = vmatpush2.msra.mxu0 0.0
    %237 = vmatprep.subr.mxu0 0.0
    %238 = vmatpush2.msra.mxu0 0.0
    %239 = vmatprep.subr.mxu0 0.0
    %240 = vmatpush2.msra.mxu0 0.0
    %241 = vmatprep.subr.mxu0 0.0
    %242 = vmatpush2.msra.mxu0 0.0
    %243 = vmatprep.subr.mxu0 0.0
    %244 = vmatpush2.msra.mxu0 0.0
    %245 = vmatprep.subr.mxu0 0.0
    %246 = vmatpush2.msra.mxu0 0.0
    %247 = vmatprep.mubr.f32.mxu0 0.0
    %248 = vmatmul.mubr.f32.gmra.mxu0 %v172
    %v249 = vpop.f32.mrf.mxu0
    %v250 = vadd.f32 %v156, %v249
    %v251 = vpop.f32.mrf.mxu0
    %252 = vmatprep.mubr.f32.mxu0 0.0
    %253 = vmatmul.mubr.f32.gmra.mxu0 %v175
    %v254 = vpop.f32.mrf.mxu0
    %v255 = vadd.f32 %v160, %v254
    %v256 = vpop.f32.mrf.mxu0
    %257 = vmatprep.mubr.f32.mxu0 0.0
    %258 = vmatmul.mubr.f32.gmra.mxu0 %v178
    %v259 = vpop.f32.mrf.mxu0
    %v260 = vadd.f32 %v164, %v259
    %v261 = vpop.f32.mrf.mxu0
    %262 = vmatprep.mubr.f32.mxu0 0.0
    %263 = vmatmul.mubr.f32.gmra.mxu0 %v181
    %v264 = vpop.f32.mrf.mxu0
    %v265 = vadd.f32 %v168, %v264
    %v266 = vpop.f32.mrf.mxu0
    %267 = vdwg.mxu0
    %v268 = vmax.f32 %v250, 0.0
    %v269 = vmax.f32 %v255, 0.0
    %v270 = vmax.f32 %v260, 0.0
    %v271 = vmax.f32 %v265, 0.0
    %272 = vset.pattern.permute.xlu0 2
    %273 = vperm.xlu0 %272, %v18
    %v274 = vpop.permute.xlu0 %273
    %276 = vset.pattern.permute.xlu0 2
    %277 = vperm.xlu0 %276, %v19
    %v278 = vpop.permute.xlu0 %277
    %280 = vset.pattern.permute.xlu0 2
    %281 = vperm.xlu0 %280, %v20
    %v282 = vpop.permute.xlu0 %281
    %284 = vset.pattern.permute.xlu0 2
    %285 = vperm.xlu0 %284, %v21
    %v286 = vpop.permute.xlu0 %285
    %v288 = vmul.f32 %v268, %v274
    %v289 = vmul.f32 %v269, %v278
    %v290 = vmul.f32 %v270, %v282
    %v291 = vmul.f32 %v271, %v286
    %v292 = vadd.f32 %v288, %v289
    %v293 = vadd.f32 %v292, %v290
    %v294 = vadd.f32 %v293, %v291
    %v295 = vrot.slane %v294, 4
    %v296 = vadd.f32 %v294, %v295
    %v297 = vrot.slane %v296, 2
    %v298 = vadd.f32 %v296, %v297
    %v299 = vrot.slane %v298, 1
    %v300 = vadd.f32 %v298, %v299
    %302 = vset.pattern.permute.xlu0 3
    %303 = vperm.xlu0 %302, %v22
    %v304 = vpop.permute.xlu0 %303
    %v306 = vadd.f32 %v300, %v304
    %307 = vst [vmem:[#allocation2] sm:$0x1] %v306
    // Predicated region
    $region18: #{tpu_custom_call.1} parent=1 // pred_check
      _
    $region19: #{tpu_custom_call.1} parent=1 // pred_check_branch
      %309 = sbr.rel (0) target = $region21
    $region20: #{tpu_custom_call.1} parent=1 // pred_region
      %s311 = ssub.s32 16, 16
      %312 = vsyncadd [#allocation3], %s311
      %s314 = sshll.u32 [#allocation2], 4
      %s315 = int_to_ptr.vmem [resolvable:$true] %s314
      %317 = dma.vmem_to_hbm [thread:$0]  %s315, 16, %s4, [#allocation3]
    $region21: #{tpu_custom_call.1} parent=1 // pred_fallthru
      _
    // Predicated region
    $region22: #{tpu_custom_call.1} parent=1 // pred_check
      _
    $region23: #{tpu_custom_call.1} parent=1 // pred_check_branch
      %319 = sbr.rel (0) target = $region25
    $region24: #{tpu_custom_call.1} parent=1 // pred_region
      %320 = dma.done [#allocation3], 16
    $region25: #{tpu_custom_call.1} parent=1 // pred_fallthru
      _
    %321 = vsyncpa [#allocation3], 1

</llo_original>
